<compile_context>
chip_gen: v7x
topology: tpu7x:2x2x1
jax: 0.10.0
libtpu: 0.0.40
codegen_flags: <defaults>
</compile_context>

<pallas_src>
import functools

import jax
import jax.numpy as jnp
from jax import lax
from jax.experimental import pallas as pl
from jax.experimental.pallas import tpu as pltpu  # noqa: F401  (TPU backend)

_BN_EPS = 1e-5
_LEAKY_SLOPE = 0.1


def _make_head_kernel(num_layers):
    """Build a kernel fusing `num_layers` BnReluFc blocks + softmax."""

    def kernel(x_ref, *refs):
        # refs = (w_0, b_0, w_1, b_1, ..., w_{L-1}, b_{L-1}, o_ref)
        o_ref = refs[-1]
        param_refs = refs[:-1]

        h = x_ref[...]
        if h.dtype != jnp.float32:
            h = h.astype(jnp.float32)

        for l in range(num_layers):          # unrolled at trace time
            w = param_refs[2 * l][...]        # (Cout_l, Cin_l)
            b = param_refs[2 * l + 1][...]    # (1, Cout_l)
            if w.dtype != jnp.float32:
                w = w.astype(jnp.float32)
            if b.dtype != jnp.float32:
                b = b.astype(jnp.float32)

            # BatchNorm1d(affine=False), training-mode batch statistics over N.
            mean = jnp.mean(h, axis=0, keepdims=True)
            centered = h - mean
            var = jnp.mean(centered * centered, axis=0, keepdims=True)
            hn = centered * lax.rsqrt(var + _BN_EPS)

            # LeakyReLU(0.1)
            hr = jnp.where(hn > 0, hn, _LEAKY_SLOPE * hn)

            # Linear: y = hr @ W^T + b, contracting the shared Cin axis
            # directly on the MXU (no in-kernel transpose of W).
            h = lax.dot_general(
                hr, w,
                dimension_numbers=(((1,), (1,)), ((), ())),
                preferred_element_type=jnp.float32,
            ) + b

        # Softmax over features (nn.Softmax() on 2-D input -> dim=1),
        # numerically stable.
        m = jnp.max(h, axis=-1, keepdims=True)
        e = jnp.exp(h - m)
        denom = jnp.sum(e, axis=-1, keepdims=True)
        o_ref[...] = (e / denom).astype(o_ref.dtype)

    return kernel


def _discriminator_head_impl(x, params):
    """x: (N, ...) any trailing dims (flattened); params: tuple of (W, b)."""
    n = x.shape[0]
    x2 = x.reshape(n, -1)
    num_layers = len(params)
    cout = params[-1][0].shape[0]

    # Whole problem is resident in a single VMEM tile (small head sizes);
    # no grid needed, so the launch cost is paid exactly once for the head.
    in_specs = [pl.BlockSpec(x2.shape, lambda: (0, 0))]
    args = [x2]
    for (w, b) in params:
        b2 = b.reshape(1, -1)
        in_specs.append(pl.BlockSpec(w.shape, lambda: (0, 0)))
        in_specs.append(pl.BlockSpec(b2.shape, lambda: (0, 0)))
        args.append(w)
        args.append(b2)

    return pl.pallas_call(
        _make_head_kernel(num_layers),
        out_shape=jax.ShapeDtypeStruct((n, cout), x.dtype),
        in_specs=in_specs,
        out_specs=pl.BlockSpec((n, cout), lambda: (0, 0)),
    )(*args)


# jit the wrapper so reshapes / the pallas_call boundary are compiled once.
discriminator_head = jax.jit(_discriminator_head_impl)


def _reference(x, params):
    h = x.reshape(x.shape[0], -1).astype(jnp.float32)
    for w, b in params:
        mean = jnp.mean(h, axis=0, keepdims=True)
        var = jnp.mean((h - mean) ** 2, axis=0, keepdims=True)
        hn = (h - mean) / jnp.sqrt(var + _BN_EPS)
        hr = jnp.where(hn > 0, hn, _LEAKY_SLOPE * hn)
        h = hr @ w.T + b
    return jax.nn.softmax(h, axis=-1)


if __name__ == "__main__":
    # DiscriminatorHead(features=[(32, 16), (16, 8)]) on a small flattened
    # feature map: x (8, 2, 4, 4) -> view -> (8, 32) -> (8, 16) -> (8, 8) -> softmax.
    features = [(32, 16), (16, 8)]
    batch = 8

    key = jax.random.PRNGKey(0)
    kx, key = jax.random.split(key)
    x = jax.random.normal(kx, (batch, 2, 4, 4), dtype=jnp.float32)

    params = []
    for (cin, cout) in features:
        kw, kb, key = jax.random.split(key, 3)
        bound = 1.0 / (cin ** 0.5)              # nn.Linear-like init scale
        w = jax.random.uniform(kw, (cout, cin), minval=-bound, maxval=bound,
                               dtype=jnp.float32)
        b = jax.random.uniform(kb, (cout,), minval=-bound, maxval=bound,
                               dtype=jnp.float32)
        params.append((w, b))
    params = tuple(params)

    out = discriminator_head(x, params)
    out = jax.block_until_ready(out)

    ref = _reference(x, params)
    assert out.shape == (batch, features[-1][1])
    assert jnp.allclose(jnp.sum(out, axis=-1), 1.0, atol=1e-5)
    assert jnp.allclose(out, ref, atol=1e-4, rtol=1e-4), "mismatch vs reference"

    print("KERNEL_OK")
</pallas_src>

<mosaic_0001>
module attributes {stable_mosaic.version = 11 : i64} {
  func.func @kernel(%arg0: memref<8x32xf32, #tpu.memory_space<vmem>>, %arg1: memref<16x32xf32, #tpu.memory_space<vmem>>, %arg2: memref<1x16xf32, #tpu.memory_space<vmem>>, %arg3: memref<8x16xf32, #tpu.memory_space<vmem>>, %arg4: memref<1x8xf32, #tpu.memory_space<vmem>>, %arg5: memref<8x8xf32, #tpu.memory_space<vmem>>) attributes {dimension_semantics = [], scalar_prefetch = 0 : i64, scratch_operands = 0 : i64, tpu.core_type = #tpu.core_type<tc>} {
    %c0 = arith.constant 0 : index
    %c0_0 = arith.constant 0 : index
    %0 = vector.load %arg0[%c0, %c0_0] : memref<8x32xf32, #tpu.memory_space<vmem>>, vector<8x32xf32>
    %c0_1 = arith.constant 0 : index
    %c0_2 = arith.constant 0 : index
    %1 = vector.load %arg1[%c0_1, %c0_2] : memref<16x32xf32, #tpu.memory_space<vmem>>, vector<16x32xf32>
    %c0_3 = arith.constant 0 : index
    %c0_4 = arith.constant 0 : index
    %2 = vector.load %arg2[%c0_3, %c0_4] : memref<1x16xf32, #tpu.memory_space<vmem>>, vector<1x16xf32>
    %cst = arith.constant dense<0.000000e+00> : vector<32xf32>
    %3 = vector.multi_reduction <add>, %0, %cst [0] : vector<8x32xf32> to vector<32xf32>
    %4 = vector.shape_cast %3 : vector<32xf32> to vector<1x32xf32>
    %cst_5 = arith.constant 8.000000e+00 : f32
    %5 = vector.broadcast %cst_5 : f32 to vector<1x32xf32>
    %6 = arith.divf %4, %5 : vector<1x32xf32>
    %7 = vector.broadcast %6 : vector<1x32xf32> to vector<8x32xf32>
    %8 = arith.subf %0, %7 : vector<8x32xf32>
    %9 = arith.mulf %8, %8 : vector<8x32xf32>
    %cst_6 = arith.constant dense<0.000000e+00> : vector<32xf32>
    %10 = vector.multi_reduction <add>, %9, %cst_6 [0] : vector<8x32xf32> to vector<32xf32>
    %11 = vector.shape_cast %10 : vector<32xf32> to vector<1x32xf32>
    %cst_7 = arith.constant 8.000000e+00 : f32
    %12 = vector.broadcast %cst_7 : f32 to vector<1x32xf32>
    %13 = arith.divf %11, %12 : vector<1x32xf32>
    %cst_8 = arith.constant 9.99999974E-6 : f32
    %14 = vector.broadcast %cst_8 : f32 to vector<1x32xf32>
    %15 = arith.addf %13, %14 : vector<1x32xf32>
    %16 = math.rsqrt %15 : vector<1x32xf32>
    %17 = vector.broadcast %16 : vector<1x32xf32> to vector<8x32xf32>
    %18 = arith.mulf %8, %17 : vector<8x32xf32>
    %cst_9 = arith.constant 0.000000e+00 : f32
    %19 = vector.broadcast %cst_9 : f32 to vector<8x32xf32>
    %20 = arith.cmpf ogt, %18, %19 : vector<8x32xf32>
    %cst_10 = arith.constant 1.000000e-01 : f32
    %21 = vector.broadcast %cst_10 : f32 to vector<8x32xf32>
    %22 = arith.mulf %21, %18 : vector<8x32xf32>
    %23 = arith.select %20, %18, %22 : vector<8x32xi1>, vector<8x32xf32>
    %cst_11 = arith.constant dense<0.000000e+00> : vector<8x16xf32>
    %24 = tpu.matmul %23, %1, %cst_11 {dimension_numbers = #tpu.dot_dimension_numbers<[1], [1], [0], [0], [0, 0, 1, 0], [], []>} : vector<8x32xf32>, vector<16x32xf32>, vector<8x16xf32> -> vector<8x16xf32>
    %25 = vector.broadcast %2 : vector<1x16xf32> to vector<8x16xf32>
    %26 = arith.addf %24, %25 : vector<8x16xf32>
    %c0_12 = arith.constant 0 : index
    %c0_13 = arith.constant 0 : index
    %27 = vector.load %arg3[%c0_12, %c0_13] : memref<8x16xf32, #tpu.memory_space<vmem>>, vector<8x16xf32>
    %c0_14 = arith.constant 0 : index
    %c0_15 = arith.constant 0 : index
    %28 = vector.load %arg4[%c0_14, %c0_15] : memref<1x8xf32, #tpu.memory_space<vmem>>, vector<1x8xf32>
    %cst_16 = arith.constant dense<0.000000e+00> : vector<16xf32>
    %29 = vector.multi_reduction <add>, %26, %cst_16 [0] : vector<8x16xf32> to vector<16xf32>
    %30 = vector.shape_cast %29 : vector<16xf32> to vector<1x16xf32>
    %cst_17 = arith.constant 8.000000e+00 : f32
    %31 = vector.broadcast %cst_17 : f32 to vector<1x16xf32>
    %32 = arith.divf %30, %31 : vector<1x16xf32>
    %33 = vector.broadcast %32 : vector<1x16xf32> to vector<8x16xf32>
    %34 = arith.subf %26, %33 : vector<8x16xf32>
    %35 = arith.mulf %34, %34 : vector<8x16xf32>
    %cst_18 = arith.constant dense<0.000000e+00> : vector<16xf32>
    %36 = vector.multi_reduction <add>, %35, %cst_18 [0] : vector<8x16xf32> to vector<16xf32>
    %37 = vector.shape_cast %36 : vector<16xf32> to vector<1x16xf32>
    %cst_19 = arith.constant 8.000000e+00 : f32
    %38 = vector.broadcast %cst_19 : f32 to vector<1x16xf32>
    %39 = arith.divf %37, %38 : vector<1x16xf32>
    %cst_20 = arith.constant 9.99999974E-6 : f32
    %40 = vector.broadcast %cst_20 : f32 to vector<1x16xf32>
    %41 = arith.addf %39, %40 : vector<1x16xf32>
    %42 = math.rsqrt %41 : vector<1x16xf32>
    %43 = vector.broadcast %42 : vector<1x16xf32> to vector<8x16xf32>
    %44 = arith.mulf %34, %43 : vector<8x16xf32>
    %cst_21 = arith.constant 0.000000e+00 : f32
    %45 = vector.broadcast %cst_21 : f32 to vector<8x16xf32>
    %46 = arith.cmpf ogt, %44, %45 : vector<8x16xf32>
    %cst_22 = arith.constant 1.000000e-01 : f32
    %47 = vector.broadcast %cst_22 : f32 to vector<8x16xf32>
    %48 = arith.mulf %47, %44 : vector<8x16xf32>
    %49 = arith.select %46, %44, %48 : vector<8x16xi1>, vector<8x16xf32>
    %cst_23 = arith.constant dense<0.000000e+00> : vector<8x8xf32>
    %50 = tpu.matmul %49, %27, %cst_23 {dimension_numbers = #tpu.dot_dimension_numbers<[1], [1], [0], [0], [0, 0, 1, 0], [], []>} : vector<8x16xf32>, vector<8x16xf32>, vector<8x8xf32> -> vector<8x8xf32>
    %51 = vector.broadcast %28 : vector<1x8xf32> to vector<8x8xf32>
    %52 = arith.addf %50, %51 : vector<8x8xf32>
    %cst_24 = arith.constant dense<0xFF800000> : vector<8xf32>
    %53 = vector.multi_reduction <maximumf>, %52, %cst_24 [1] : vector<8x8xf32> to vector<8xf32>
    %54 = vector.shape_cast %53 : vector<8xf32> to vector<8x1xf32>
    %55 = vector.broadcast %54 : vector<8x1xf32> to vector<8x8xf32>
    %56 = arith.subf %52, %55 : vector<8x8xf32>
    %57 = math.exp %56 : vector<8x8xf32>
    %cst_25 = arith.constant dense<0.000000e+00> : vector<8xf32>
    %58 = vector.multi_reduction <add>, %57, %cst_25 [1] : vector<8x8xf32> to vector<8xf32>
    %59 = vector.shape_cast %58 : vector<8xf32> to vector<8x1xf32>
    %60 = vector.broadcast %59 : vector<8x1xf32> to vector<8x8xf32>
    %61 = arith.divf %57, %60 : vector<8x8xf32>
    %c0_26 = arith.constant 0 : index
    %c0_27 = arith.constant 0 : index
    %62 = vector.load %arg5[%c0_26, %c0_27] : memref<8x8xf32, #tpu.memory_space<vmem>>, vector<8x8xf32>
    tpu.vector_store %arg5[%c0_26, %c0_27], %61 {strides = array<i32>} : memref<8x8xf32, #tpu.memory_space<vmem>>, vector<8x8xf32>,
    return
  }
}

</mosaic_0001>

<llo_original>
// kernel: _discriminator_head_impl.1
$region0: #{_discriminator_head_impl.1}
  #allocation0 [shape = 'u32[]', space=smem, size = 0x4, offset = 0x4, fixed_abs, tag = 'smem constant byte address 0x4 - core index']
  #allocation1 [shape = 'u32[144,128]{1,0:T(1,128)}', space=vmem, size = 0x12000, scoped, tag = 'internal scratch']
  %s0 = inlined_call_operand.vmem [shape: f32[8,32], index: 0, kind: input, shape index: {}]
  %s1 = inlined_call_operand.vmem [shape: f32[16,32], index: 1, kind: input, shape index: {}]
  %s2 = inlined_call_operand.vmem [shape: f32[1,16], index: 2, kind: input, shape index: {}]
  %s3 = inlined_call_operand.vmem [shape: f32[8,16], index: 3, kind: input, shape index: {}]
  %s4 = inlined_call_operand.vmem [shape: f32[1,8], index: 4, kind: input, shape index: {}]
  %s5 = inlined_call_operand.hbm [shape: f32[8,8], index: 5, kind: output, shape index: {}]
  %s6 = sld [smem:[#allocation0]]
  $region30: #{_discriminator_head_impl.1} parent=0
    _
  %s8 = ssub.s32 1, %s6
  %s9 = scalar_select 0, %s8, %s6
  $region1: #{_discriminator_head_impl.1} parent=0
    #allocation2 [shape = 'u8[4096]{0}', space=vmem, size = 0x1000, scoped, tag = 'output window, operand 0, single buffered']
    #allocation3 [shape = 's32[1]{0}', space=sflag, size = 0x4, scoped, tag = 'scoped memory for _discriminator_head_impl.1']
    %10 = vsyncpa [#allocation3], 0
    // Predicated region
    $region2: #{_discriminator_head_impl.1} parent=1 // pred_check
      _
    $region3: #{_discriminator_head_impl.1} parent=1 // pred_check_branch
      %12 = sbr.rel (0) target = $region5
    $region4: #{_discriminator_head_impl.1} parent=1 // pred_region
      _
    $region5: #{_discriminator_head_impl.1} parent=1 // pred_fallthru
      _
    // Predicated region
    $region6: #{_discriminator_head_impl.1} parent=1 // pred_check
      _
    $region7: #{_discriminator_head_impl.1} parent=1 // pred_check_branch
      %14 = sbr.rel (0) target = $region9
    $region8: #{_discriminator_head_impl.1} parent=1 // pred_region
      _
    $region9: #{_discriminator_head_impl.1} parent=1 // pred_fallthru
      _
    // Predicated region
    $region10: #{_discriminator_head_impl.1} parent=1 // pred_check
      _
    $region11: #{_discriminator_head_impl.1} parent=1 // pred_check_branch
      %16 = sbr.rel (0) target = $region13
    $region12: #{_discriminator_head_impl.1} parent=1 // pred_region
      _
    $region13: #{_discriminator_head_impl.1} parent=1 // pred_fallthru
      _
    // Predicated region
    $region14: #{_discriminator_head_impl.1} parent=1 // pred_check
      _
    $region15: #{_discriminator_head_impl.1} parent=1 // pred_check_branch
      %18 = sbr.rel (0) target = $region17
    $region16: #{_discriminator_head_impl.1} parent=1 // pred_region
      _
    $region17: #{_discriminator_head_impl.1} parent=1 // pred_fallthru
      _
    // Predicated region
    $region18: #{_discriminator_head_impl.1} parent=1 // pred_check
      _
    $region19: #{_discriminator_head_impl.1} parent=1 // pred_check_branch
      %20 = sbr.rel (0) target = $region21
    $region20: #{_discriminator_head_impl.1} parent=1 // pred_region
      _
    $region21: #{_discriminator_head_impl.1} parent=1 // pred_fallthru
      _
    %v21 = vld [vmem:[%s0] sm:$0xff]
    %v22 = vld [vmem:[%s1] sm:$0xff]
    %v23 = vld [vmem:[%s1 + $0x8] sm:$0xff]
    %v24 = vld [vmem:[%s2] sm:$0x1]
    %vm25 = vcmask 261120
    %v26 = vsel %vm25, %v21, 0.0
    %v27 = vrot.slane %v26, 4
    %v28 = vadd.f32 %v26, %v27
    %v29 = vrot.slane %v28, 2
    %v30 = vadd.f32 %v28, %v29
    %v31 = vrot.slane %v30, 1
    %v32 = vadd.f32 %v30, %v31
    %v33 = vrcp.pop 8.0
    %v34 = vmul.f32 %v32, %v33
    %v35 = vsub.f32 %v21, %v34
    %v36 = vmul.f32 %v35, %v35
    %v37 = vsel %vm25, %v36, 0.0
    %v38 = vrot.slane %v37, 4
    %v39 = vadd.f32 %v37, %v38
    %v40 = vrot.slane %v39, 2
    %v41 = vadd.f32 %v39, %v40
    %v42 = vrot.slane %v41, 1
    %v43 = vadd.f32 %v41, %v42
    %v44 = vmul.f32 %v43, %v33
    %v45 = vadd.f32 %v44, 1e-05
    %v46 = vrsqrt.pop %v45
    %v47 = vmul.f32 %v35, %v46
    %vm48 = vcmp.gt.f32.partialorder %v47, 0.0
    %v49 = vmul.f32 %v47, 0.1
    %v50 = vsel %vm48, %v47, %v49
    %v52 = vlaneseq
    %v53 = vshrl.u32 %v52, 7
    %v54 = vsub.s32 0, %v53
    %v55 = vrot.slane %v24, %v54
    %v58 = vsel %vm25, %v50, 0
    %v61 = vsel %vm25, %v22, 0
    %v64 = vsel %vm25, %v23, 0
    %66 = vmatprep.subr.mxu0 0.0
    %67 = vmatpush1.xpose.msra.mxu0 %v61
    %68 = vmatprep.subr.mxu0 0.0
    %69 = vmatpush1.xpose.msra.mxu0 %v64
    %70 = vmatprep.subr.mxu0 0.0
    %71 = vmatpush1.xpose.msra.mxu0 0.0
    %72 = vmatprep.subr.mxu0 0.0
    %73 = vmatpush1.xpose.msra.mxu0 0.0
    %74 = vmatprep.subr.mxu0 0.0
    %75 = vmatpush1.xpose.msra.mxu0 0.0
    %76 = vmatprep.subr.mxu0 0.0
    %77 = vmatpush1.xpose.msra.mxu0 0.0
    %78 = vmatprep.subr.mxu0 0.0
    %79 = vmatpush1.xpose.msra.mxu0 0.0
    %80 = vmatprep.subr.mxu0 0.0
    %81 = vmatpush1.xpose.msra.mxu0 0.0
    %82 = vmatprep.subr.mxu0 0.0
    %83 = vmatpush1.xpose.msra.mxu0 0.0
    %84 = vmatprep.subr.mxu0 0.0
    %85 = vmatpush1.xpose.msra.mxu0 0.0
    %86 = vmatprep.subr.mxu0 0.0
    %87 = vmatpush1.xpose.msra.mxu0 0.0
    %88 = vmatprep.subr.mxu0 0.0
    %89 = vmatpush1.xpose.msra.mxu0 0.0
    %90 = vmatprep.subr.mxu0 0.0
    %91 = vmatpush1.xpose.msra.mxu0 0.0
    %92 = vmatprep.subr.mxu0 0.0
    %93 = vmatpush1.xpose.msra.mxu0 0.0
    %94 = vmatprep.subr.mxu0 0.0
    %95 = vmatpush1.xpose.msra.mxu0 0.0
    %96 = vmatprep.subr.mxu0 0.0
    %97 = vmatpush1.xpose.msra.mxu0 0.0
    %98 = vmatprep.subr.mxu0 0.0
    %99 = vmatpush1.xpose.msra.mxu0 0.0
    %100 = vmatprep.subr.mxu0 0.0
    %101 = vmatpush1.xpose.msra.mxu0 0.0
    %102 = vmatprep.subr.mxu0 0.0
    %103 = vmatpush1.xpose.msra.mxu0 0.0
    %104 = vmatprep.subr.mxu0 0.0
    %105 = vmatpush1.xpose.msra.mxu0 0.0
    %106 = vmatprep.subr.mxu0 0.0
    %107 = vmatpush1.xpose.msra.mxu0 0.0
    %108 = vmatprep.subr.mxu0 0.0
    %109 = vmatpush1.xpose.msra.mxu0 0.0
    %110 = vmatprep.subr.mxu0 0.0
    %111 = vmatpush1.xpose.msra.mxu0 0.0
    %112 = vmatprep.subr.mxu0 0.0
    %113 = vmatpush1.xpose.msra.mxu0 0.0
    %114 = vmatprep.subr.mxu0 0.0
    %115 = vmatpush1.xpose.msra.mxu0 0.0
    %116 = vmatprep.subr.mxu0 0.0
    %117 = vmatpush1.xpose.msra.mxu0 0.0
    %118 = vmatprep.subr.mxu0 0.0
    %119 = vmatpush1.xpose.msra.mxu0 0.0
    %120 = vmatprep.subr.mxu0 0.0
    %121 = vmatpush1.xpose.msra.mxu0 0.0
    %122 = vmatprep.subr.mxu0 0.0
    %123 = vmatpush1.xpose.msra.mxu0 0.0
    %124 = vmatprep.subr.mxu0 0.0
    %125 = vmatpush1.xpose.msra.mxu0 0.0
    %126 = vmatprep.subr.mxu0 0.0
    %127 = vmatpush1.xpose.msra.mxu0 0.0
    %128 = vmatprep.subr.mxu0 0.0
    %129 = vmatpush1.xpose.msra.mxu0 0.0
    %130 = vmatprep.mubr.f32.mxu0 0.0
    %131 = vmatmul.mubr.f32.gmra.mrb[0].mxu0 %v58
    %v132 = vpop.f32.mrb[0].mxu0
    %v133 = vadd.f32 %v55, %v132
    %v134 = vpop.f32.mrb[0].mxu0
    %135 = vdwg.mxu0
    %v136 = vld [vmem:[%s3] sm:$0xff]
    %v137 = vld [vmem:[%s4] sm:$0x1]
    %vm138 = vcmask 130048
    %v139 = vsel %vm138, %v133, 0.0
    %v140 = vrot.slane %v139, 4
    %v141 = vadd.f32 %v139, %v140
    %v142 = vrot.slane %v141, 2
    %v143 = vadd.f32 %v141, %v142
    %v144 = vrot.slane %v143, 1
    %v145 = vadd.f32 %v143, %v144
    %v146 = vmul.f32 %v145, %v33
    %v147 = vsub.f32 %v133, %v146
    %v148 = vmul.f32 %v147, %v147
    %v149 = vsel %vm138, %v148, 0.0
    %v150 = vrot.slane %v149, 4
    %v151 = vadd.f32 %v149, %v150
    %v152 = vrot.slane %v151, 2
    %v153 = vadd.f32 %v151, %v152
    %v154 = vrot.slane %v153, 1
    %v155 = vadd.f32 %v153, %v154
    %v156 = vmul.f32 %v155, %v33
    %v157 = vadd.f32 %v156, 1e-05
    %v158 = vrsqrt.pop %v157
    %v159 = vmul.f32 %v147, %v158
    %vm160 = vcmp.gt.f32.partialorder %v159, 0.0
    %v161 = vmul.f32 %v159, 0.1
    %v162 = vsel %vm160, %v159, %v161
    %v164 = vlaneseq
    %v165 = vshrl.u32 %v164, 7
    %v166 = vsub.s32 0, %v165
    %v167 = vrot.slane %v137, %v166
    %v170 = vsel %vm138, %v162, 0
    %v173 = vsel %vm138, %v136, 0
    %175 = vmatprep.subr.mxu0 0.0
    %176 = vmatpush1.xpose.msra.mxu0 %v173
    %177 = vmatprep.subr.mxu0 0.0
    %178 = vmatpush1.xpose.msra.mxu0 0.0
    %179 = vmatprep.subr.mxu0 0.0
    %180 = vmatpush1.xpose.msra.mxu0 0.0
    %181 = vmatprep.subr.mxu0 0.0
    %182 = vmatpush1.xpose.msra.mxu0 0.0
    %183 = vmatprep.subr.mxu0 0.0
    %184 = vmatpush1.xpose.msra.mxu0 0.0
    %185 = vmatprep.subr.mxu0 0.0
    %186 = vmatpush1.xpose.msra.mxu0 0.0
    %187 = vmatprep.subr.mxu0 0.0
    %188 = vmatpush1.xpose.msra.mxu0 0.0
    %189 = vmatprep.subr.mxu0 0.0
    %190 = vmatpush1.xpose.msra.mxu0 0.0
    %191 = vmatprep.subr.mxu0 0.0
    %192 = vmatpush1.xpose.msra.mxu0 0.0
    %193 = vmatprep.subr.mxu0 0.0
    %194 = vmatpush1.xpose.msra.mxu0 0.0
    %195 = vmatprep.subr.mxu0 0.0
    %196 = vmatpush1.xpose.msra.mxu0 0.0
    %197 = vmatprep.subr.mxu0 0.0
    %198 = vmatpush1.xpose.msra.mxu0 0.0
    %199 = vmatprep.subr.mxu0 0.0
    %200 = vmatpush1.xpose.msra.mxu0 0.0
    %201 = vmatprep.subr.mxu0 0.0
    %202 = vmatpush1.xpose.msra.mxu0 0.0
    %203 = vmatprep.subr.mxu0 0.0
    %204 = vmatpush1.xpose.msra.mxu0 0.0
    %205 = vmatprep.subr.mxu0 0.0
    %206 = vmatpush1.xpose.msra.mxu0 0.0
    %207 = vmatprep.subr.mxu0 0.0
    %208 = vmatpush1.xpose.msra.mxu0 0.0
    %209 = vmatprep.subr.mxu0 0.0
    %210 = vmatpush1.xpose.msra.mxu0 0.0
    %211 = vmatprep.subr.mxu0 0.0
    %212 = vmatpush1.xpose.msra.mxu0 0.0
    %213 = vmatprep.subr.mxu0 0.0
    %214 = vmatpush1.xpose.msra.mxu0 0.0
    %215 = vmatprep.subr.mxu0 0.0
    %216 = vmatpush1.xpose.msra.mxu0 0.0
    %217 = vmatprep.subr.mxu0 0.0
    %218 = vmatpush1.xpose.msra.mxu0 0.0
    %219 = vmatprep.subr.mxu0 0.0
    %220 = vmatpush1.xpose.msra.mxu0 0.0
    %221 = vmatprep.subr.mxu0 0.0
    %222 = vmatpush1.xpose.msra.mxu0 0.0
    %223 = vmatprep.subr.mxu0 0.0
    %224 = vmatpush1.xpose.msra.mxu0 0.0
    %225 = vmatprep.subr.mxu0 0.0
    %226 = vmatpush1.xpose.msra.mxu0 0.0
    %227 = vmatprep.subr.mxu0 0.0
    %228 = vmatpush1.xpose.msra.mxu0 0.0
    %229 = vmatprep.subr.mxu0 0.0
    %230 = vmatpush1.xpose.msra.mxu0 0.0
    %231 = vmatprep.subr.mxu0 0.0
    %232 = vmatpush1.xpose.msra.mxu0 0.0
    %233 = vmatprep.subr.mxu0 0.0
    %234 = vmatpush1.xpose.msra.mxu0 0.0
    %235 = vmatprep.subr.mxu0 0.0
    %236 = vmatpush1.xpose.msra.mxu0 0.0
    %237 = vmatprep.subr.mxu0 0.0
    %238 = vmatpush1.xpose.msra.mxu0 0.0
    %239 = vmatprep.mubr.f32.mxu0 0.0
    %240 = vmatmul.mubr.f32.gmra.mrb[0].mxu0 %v170
    %v241 = vpop.f32.mrb[0].mxu0
    %v242 = vadd.f32 %v167, %v241
    %v243 = vpop.f32.mrb[0].mxu0
    %244 = vdwg.mxu0
    %vm245 = vcmask 64512
    %v246 = vsel %vm245, %v242, -inf
    %247 = vmax.xlane.f32.xlu0 %v246
    %v248 = vpop.xlane.xlu0 %247
    %v249 = vsub.f32 %v242, %v248
    %v250 = vmul.f32 %v249, 1.442695
    %v251 = vpow.pop %v250
    %v252 = vsel %vm245, %v251, 0.0
    %253 = vadd.xlane.f32.xlu0 %v252
    %v254 = vpop.xlane.xlu0 %253
    %v255 = vrcp.pop %v254
    %v256 = vmul.f32 %v251, %v255
    %257 = vst.msk [vmem:[#allocation2] sm:$0xff] %vm245, %v256
    // Predicated region
    $region22: #{_discriminator_head_impl.1} parent=1 // pred_check
      _
    $region23: #{_discriminator_head_impl.1} parent=1 // pred_check_branch
      %259 = sbr.rel (0) target = $region25
    $region24: #{_discriminator_head_impl.1} parent=1 // pred_region
      %s261 = ssub.s32 128, 128
      %262 = vsyncadd [#allocation3], %s261
      %s264 = sshll.u32 [#allocation2], 4
      %s265 = int_to_ptr.vmem [resolvable:$true] %s264
      %267 = dma.vmem_to_hbm [thread:$0]  %s265, 128, %s5, [#allocation3]
    $region25: #{_discriminator_head_impl.1} parent=1 // pred_fallthru
      _
    // Predicated region
    $region26: #{_discriminator_head_impl.1} parent=1 // pred_check
      _
    $region27: #{_discriminator_head_impl.1} parent=1 // pred_check_branch
      %269 = sbr.rel (0) target = $region29
    $region28: #{_discriminator_head_impl.1} parent=1 // pred_region
      %270 = dma.done [#allocation3], 128
    $region29: #{_discriminator_head_impl.1} parent=1 // pred_fallthru
      _
    %271 = vsyncpa [#allocation3], 1

</llo_original>
